<compile_context>
chip_gen: v7x
topology: tpu7x:2x2x1
jax: 0.10.0
libtpu: 0.0.40
codegen_flags: <defaults>
</compile_context>

<pallas_src>
import math

import jax
import jax.numpy as jnp
from jax.experimental import pallas as pl
from jax.experimental.pallas import tpu as pltpu


def _conv1x1_bias_kernel(x_ref, w_ref, b_ref, o_ref):
    # x_ref: (C_in, tile_p), w_ref: (C_out, C_in), b_ref: (C_out, 1)
    acc = jnp.dot(w_ref[...], x_ref[...], preferred_element_type=jnp.float32)
    o_ref[...] = (acc + b_ref[...]).astype(o_ref.dtype)


def _choose_tile_p(n, p, max_tile=16384, min_steps=4):
    """Largest lane-dense (multiple-of-128) pixel tile, capped at max_tile,
    that still yields >= min_steps total grid steps (n * pixel-steps) so the
    work shards across both v7x TensorCores with a balanced split."""
    if p <= 128:
        return p  # full-extent last dim is always a legal block dim
    steps_p = max(1, math.ceil(min_steps / n))       # pixel-axis steps we want
    tile = math.ceil(p / steps_p)
    tile = ((tile + 127) // 128) * 128               # keep stores lane-dense
    return max(128, min(tile, max_tile))


def conv1x1_bias(x_flat, w_eff, b_eff, *, tile_p=None):
    """x_flat: (N, C_in, P) f32, w_eff: (C_out, C_in) f32, b_eff: (C_out, 1) f32
    -> (N, C_out, P) f32 computed as w_eff @ x_flat + b_eff."""
    n, c_in, p = x_flat.shape
    c_out = w_eff.shape[0]
    if tile_p is None:
        tile_p = _choose_tile_p(n, p)
    grid = (n, pl.cdiv(p, tile_p))  # ragged last pixel block is OK (per-column math)

    cost = pl.CostEstimate(
        flops=2 * c_in * c_out * n * p,
        transcendentals=0,
        bytes_accessed=4 * (n * c_in * p + n * c_out * p + c_out * c_in + c_out),
    )

    return pl.pallas_call(
        _conv1x1_bias_kernel,
        out_shape=jax.ShapeDtypeStruct((n, c_out, p), jnp.float32),
        grid_spec=pltpu.PrefetchScalarGridSpec(
            num_scalar_prefetch=0,
            grid=grid,
            in_specs=[
                pl.BlockSpec((None, c_in, tile_p), lambda b, i: (b, 0, i)),
                pl.BlockSpec((c_out, c_in), lambda b, i: (0, 0)),
                pl.BlockSpec((c_out, 1), lambda b, i: (0, 0)),
            ],
            out_specs=pl.BlockSpec((None, c_out, tile_p), lambda b, i: (b, 0, i)),
        ),
        compiler_params=pltpu.CompilerParams(
            dimension_semantics=("parallel", "parallel")),
        cost_estimate=cost,
    )(x_flat, w_eff, b_eff)


def model_forward(x, w1, b1, w2, b2):
    """x: (N, C_in, H, W) NCHW (matches PyTorch). Returns (N, 8, H+2, W+2)."""
    del w2, b2  # TODO(synk): v3 = conv2(v2) is dead code in the PyTorch forward.
    n, c_in, h, w = x.shape
    c_out = w1.shape[0]

    # Fold v4 = 2*v1 - 3.45 into the parameters (done once, negligible cost).
    w_eff = (2.0 * w1).astype(jnp.float32)                         # (C_out, C_in)
    b_eff = (2.0 * b1 - 3.45).astype(jnp.float32).reshape(c_out, 1)  # (C_out, 1)

    # Pad the cheap 3-channel input once (the padding=1 ring).  On the ring the
    # padded x is zero, so w_eff @ 0 + b_eff == b_eff — the kernel therefore
    # writes the complete, final padded output with no post-processing pass.
    xp = jnp.pad(x.astype(jnp.float32), ((0, 0), (0, 0), (1, 1), (1, 1)))
    hp, wp = h + 2, w + 2
    x_flat = xp.reshape(n, c_in, hp * wp)     # NCHW reshape: free bitcast

    y = conv1x1_bias(x_flat, w_eff, b_eff)    # (N, C_out, (H+2)*(W+2))
    return y.reshape(n, c_out, hp, wp)        # free bitcast


def _reference(x, w1, b1):
    xp = jnp.pad(x, ((0, 0), (0, 0), (1, 1), (1, 1)))
    v1 = jnp.einsum("nchw,oc->nohw", xp, w1) + b1[None, :, None, None]
    return 2.0 * v1 - 3.45


if __name__ == "__main__":
    key = jax.random.PRNGKey(0)
    kx, k1, k2, k3, k4 = jax.random.split(key, 5)

    # Conv2d(3,8,1) / Conv2d(8,8,1): 1x1 kernels stored as plain (out, in) mats.
    w1 = jax.random.normal(k1, (8, 3), dtype=jnp.float32) * 0.1
    b1 = jax.random.normal(k2, (8,), dtype=jnp.float32) * 0.1
    w2 = jax.random.normal(k3, (8, 8), dtype=jnp.float32) * 0.1
    b2 = jax.random.normal(k4, (8,), dtype=jnp.float32) * 0.1

    fwd = jax.jit(model_forward)

    # Small shape: grid = (2, 2) -> 4 parallel steps (both v7x TCs busy).
    x_small = jax.random.normal(kx, (2, 3, 16, 16), dtype=jnp.float32)
    out = jax.block_until_ready(fwd(x_small, w1, b1, w2, b2))
    assert out.shape == (2, 8, 18, 18), out.shape
    assert jnp.allclose(out, _reference(x_small, w1, b1), atol=1e-4, rtol=1e-4), \
        "mismatch vs reference (small shape)"

    # Original spec shape (1, 3, 64, 64): padded pixel axis split 4 ways (grid (1, 4)).
    x_spec = jax.random.normal(kx, (1, 3, 64, 64), dtype=jnp.float32)
    out2 = jax.block_until_ready(fwd(x_spec, w1, b1, w2, b2))
    assert out2.shape == (1, 8, 66, 66), out2.shape
    assert jnp.allclose(out2, _reference(x_spec, w1, b1), atol=1e-4, rtol=1e-4), \
        "mismatch vs reference (spec shape)"

    print("KERNEL_OK")
</pallas_src>

<mosaic_0001>
module attributes {stable_mosaic.version = 11 : i64} {
  func.func @_conv1x1_bias_kernel(%arg0: i32, %arg1: i32, %arg2: memref<1x3x256xf32, #tpu.memory_space<vmem>>, %arg3: memref<8x3xf32, #tpu.memory_space<vmem>>, %arg4: memref<8x1xf32, #tpu.memory_space<vmem>>, %arg5: memref<1x8x256xf32, #tpu.memory_space<vmem>>) attributes {dimension_semantics = [#tpu.dimension_semantics<parallel>, #tpu.dimension_semantics<parallel>], iteration_bounds = array<i64: 2, 2>, scalar_prefetch = 0 : i64, scratch_operands = 0 : i64, tpu.core_type = #tpu.core_type<tc>, window_params = [{transform_indices = @transform_0, window_bounds = array<i64: 1, 3, 256>}, {pipeline_mode = #tpu.pipeline_mode<synchronous>, transform_indices = @transform_1, window_bounds = array<i64: 8, 3>}, {pipeline_mode = #tpu.pipeline_mode<synchronous>, transform_indices = @transform_2, window_bounds = array<i64: 8, 1>}, {transform_indices = @transform_3, window_bounds = array<i64: 1, 8, 256>}]} {
    %c0 = arith.constant 0 : index
    %c0_0 = arith.constant 0 : index
    %0 = vector.load %arg3[%c0, %c0_0] : memref<8x3xf32, #tpu.memory_space<vmem>>, vector<8x3xf32>
    %c0_1 = arith.constant 0 : index
    %c0_2 = arith.constant 0 : index
    %c0_3 = arith.constant 0 : index
    %1 = vector.load %arg2[%c0_1, %c0_2, %c0_3] : memref<1x3x256xf32, #tpu.memory_space<vmem>>, vector<1x3x256xf32>
    %2 = vector.shape_cast %1 : vector<1x3x256xf32> to vector<3x256xf32>
    %cst = arith.constant dense<0.000000e+00> : vector<8x256xf32>
    %3 = tpu.matmul %0, %2, %cst {dimension_numbers = #tpu.dot_dimension_numbers<[1], [0], [0], [1], [0, 0, 1, 1], [], []>} : vector<8x3xf32>, vector<3x256xf32>, vector<8x256xf32> -> vector<8x256xf32>
    %c0_4 = arith.constant 0 : index
    %c0_5 = arith.constant 0 : index
    %4 = vector.load %arg4[%c0_4, %c0_5] : memref<8x1xf32, #tpu.memory_space<vmem>>, vector<8x1xf32>
    %5 = vector.broadcast %4 : vector<8x1xf32> to vector<8x256xf32>
    %6 = arith.addf %3, %5 : vector<8x256xf32>
    %c0_6 = arith.constant 0 : index
    %c0_7 = arith.constant 0 : index
    %c0_8 = arith.constant 0 : index
    %7 = vector.load %arg5[%c0_6, %c0_7, %c0_8] : memref<1x8x256xf32, #tpu.memory_space<vmem>>, vector<1x8x256xf32>
    %8 = vector.shape_cast %7 : vector<1x8x256xf32> to vector<8x256xf32>
    %9 = vector.shape_cast %6 : vector<8x256xf32> to vector<1x8x256xf32>
    tpu.vector_store %arg5[%c0_6, %c0_7, %c0_8], %9 {strides = array<i32>} : memref<1x8x256xf32, #tpu.memory_space<vmem>>, vector<1x8x256xf32>,
    return
  }
  func.func @transform_0(%arg0: i32, %arg1: i32) -> (i32, i32, i32) {
    %c0_i32 = arith.constant 0 : i32
    %c0_i32_0 = arith.constant 0 : i32
    return %arg0, %c0_i32, %arg1 : i32, i32, i32
  }
  func.func @transform_1(%arg0: i32, %arg1: i32) -> (i32, i32) {
    %c0_i32 = arith.constant 0 : i32
    %c0_i32_0 = arith.constant 0 : i32
    %c0_i32_1 = arith.constant 0 : i32
    return %c0_i32, %c0_i32_0 : i32, i32
  }
  func.func @transform_2(%arg0: i32, %arg1: i32) -> (i32, i32) {
    %c0_i32 = arith.constant 0 : i32
    %c0_i32_0 = arith.constant 0 : i32
    %c0_i32_1 = arith.constant 0 : i32
    return %c0_i32, %c0_i32_0 : i32, i32
  }
  func.func @transform_3(%arg0: i32, %arg1: i32) -> (i32, i32, i32) {
    %c0_i32 = arith.constant 0 : i32
    %c0_i32_0 = arith.constant 0 : i32
    return %arg0, %c0_i32, %arg1 : i32, i32, i32
  }
}

</mosaic_0001>

<llo_original>
// kernel: model_forward.1
$region0: #{model_forward.1}
  #allocation0 [shape = 'u32[]', space=smem, size = 0x4, offset = 0x4, fixed_abs, tag = 'smem constant byte address 0x4 - core index']
  #allocation1 [shape = 'u32[144,128]{1,0:T(1,128)}', space=vmem, size = 0x12000, scoped, tag = 'internal scratch']
  %s0 = inlined_call_operand.vmem [shape: f32[2,3,324], index: 0, kind: input, shape index: {}]
  %s1 = inlined_call_operand.vmem [shape: f32[8,3], index: 1, kind: input, shape index: {}]
  %s2 = inlined_call_operand.vmem [shape: f32[8,1], index: 2, kind: input, shape index: {}]
  %s3 = inlined_call_operand.vmem [shape: f32[2,8,324], index: 3, kind: output, shape index: {}]
  %s4 = sld [smem:[#allocation0]]
  $region107: #{model_forward.1} parent=0
    _
  %s6 = ssub.s32 1, %s4
  %s7 = scalar_select 0, %s6, %s4
  $region1: #{model_forward.1} parent=0
    #allocation2 [shape = 'u8[16384]{0}', space=vmem, size = 0x4000, scoped, tag = 'output window, operand 0']
    loop: start=0, step=1, limit=6
    $region2: #{model_forward.1} parent=1 // loop_pre_header
      _
    $region3: #{model_forward.1} parent=1 // loop_header
      %s9 = sphi 0, %s13
      %p10 = scmp.ge.s32.totalorder %s9, 6
      %s16 = sphi 0, %s28
      %s17 = sphi 0, %s24
      %s18 = sphi 0, %s16
      %s19 = sphi 0, %s17
      %s20 = sphi 0, %s18
      %s21 = sphi 0, %s19
      %s33 = sphi 0, %s35
      %s36 = sphi 0, %s33
      %s37 = sphi 0, %s36
      %s53 = sphi 0, %s37
      %s57 = sphi 0, %s57
      %s59 = sphi 0, %s57
      %s60 = sphi 0, %s59
      %s74 = sphi 0, %s60
      %s78 = sphi 0, %s78
      %s80 = sphi 0, %s78
      %s81 = sphi 0, %s80
      %s95 = sphi 0, %s81
      %s103 = sphi 0, %s105
      %s106 = sphi 0, %s103
      %s107 = sphi 0, %s106
      %s123 = sphi 0, %s107
    $region4: #{model_forward.1} parent=1 // loop_header_branch
      %12 = sbr.rel (%p10) target = $region8
    $region5: #{model_forward.1} parent=1 // loop_body
      %s14 = ssub.s32 %s9, 1
      %s15 = ssub.s32 %s9, 2
      %s22 = sadd.s32 1, %s17
      %p23 = scmp.ge.s32.totalorder %s22, 2
      %s24 = scalar_select %p23, 0, %s22
      %s25 = sadd.s32 1, %s16
      %s26 = scalar_select %p23, %s25, %s16
      %p27 = scmp.ge.s32.totalorder %s26, 2
      %s28 = scalar_select %p27, 0, %s26
      %s29 = ssub.s32 %s16, %s28
      %s30 = ssub.s32 %s17, %s24
      %s31 = sor.u32 %s29, %s30
      %p32 = scmp.eq.s32.totalorder %s31, 0
      %s34 = sadd.s32 %s33, 1
      %s35 = scalar_select %p32, %s33, %s34
      %p38 = pneg %p32
      %p39 = scmp.eq.s32.totalorder %s9, 3
      %p40 = por %p38, %p39
      %p41 = scmp.ne.s32.totalorder %s33, %s36
      %p42 = scmp.eq.s32.totalorder %s9, 0
      %p43 = por %p41, %p42
      %p44 = scmp.ne.s32.totalorder %s33, %s36
      %p45 = scmp.eq.s32.totalorder %s14, 3
      %p46 = por %p44, %p45
      %p47 = scmp.ne.s32.totalorder %s36, %s37
      %p48 = scmp.eq.s32.totalorder %s14, 0
      %p49 = por %p47, %p48
      %p50 = scmp.ne.s32.totalorder %s36, %s37
      %p51 = scmp.eq.s32.totalorder %s15, 3
      %p52 = por %p50, %p51
      %p54 = scmp.ne.s32.totalorder %s37, %s53
      %p55 = scmp.eq.s32.totalorder %s15, 0
      %p56 = por %p54, %p55
      %s58 = sadd.s32 %s57, 1
      %p61 = scmp.eq.s32.totalorder %s9, 3
      %p62 = scmp.ne.s32.totalorder %s57, %s59
      %p63 = scmp.eq.s32.totalorder %s9, 0
      %p64 = por %p62, %p63
      %p65 = scmp.ne.s32.totalorder %s57, %s59
      %p66 = scmp.eq.s32.totalorder %s14, 3
      %p67 = por %p65, %p66
      %p68 = scmp.ne.s32.totalorder %s59, %s60
      %p69 = scmp.eq.s32.totalorder %s14, 0
      %p70 = por %p68, %p69
      %p71 = scmp.ne.s32.totalorder %s59, %s60
      %p72 = scmp.eq.s32.totalorder %s15, 3
      %p73 = por %p71, %p72
      %p75 = scmp.ne.s32.totalorder %s60, %s74
      %p76 = scmp.eq.s32.totalorder %s15, 0
      %p77 = por %p75, %p76
      %s79 = sadd.s32 %s78, 1
      %p82 = scmp.eq.s32.totalorder %s9, 3
      %p83 = scmp.ne.s32.totalorder %s78, %s80
      %p84 = scmp.eq.s32.totalorder %s9, 0
      %p85 = por %p83, %p84
      %p86 = scmp.ne.s32.totalorder %s78, %s80
      %p87 = scmp.eq.s32.totalorder %s14, 3
      %p88 = por %p86, %p87
      %p89 = scmp.ne.s32.totalorder %s80, %s81
      %p90 = scmp.eq.s32.totalorder %s14, 0
      %p91 = por %p89, %p90
      %p92 = scmp.ne.s32.totalorder %s80, %s81
      %p93 = scmp.eq.s32.totalorder %s15, 3
      %p94 = por %p92, %p93
      %p96 = scmp.ne.s32.totalorder %s81, %s95
      %p97 = scmp.eq.s32.totalorder %s15, 0
      %p98 = por %p96, %p97
      %s99 = ssub.s32 %s16, %s28
      %s100 = ssub.s32 %s17, %s24
      %s101 = sor.u32 %s99, %s100
      %p102 = scmp.eq.s32.totalorder %s101, 0
      %s104 = sadd.s32 %s103, 1
      %s105 = scalar_select %p102, %s103, %s104
      %p108 = pneg %p102
      %p109 = scmp.eq.s32.totalorder %s9, 3
      %p110 = por %p108, %p109
      %p111 = scmp.ne.s32.totalorder %s103, %s106
      %p112 = scmp.eq.s32.totalorder %s9, 0
      %p113 = por %p111, %p112
      %p114 = scmp.ne.s32.totalorder %s103, %s106
      %p115 = scmp.eq.s32.totalorder %s14, 3
      %p116 = por %p114, %p115
      %p117 = scmp.ne.s32.totalorder %s106, %s107
      %p118 = scmp.eq.s32.totalorder %s14, 0
      %p119 = por %p117, %p118
      %p120 = scmp.ne.s32.totalorder %s106, %s107
      %p121 = scmp.eq.s32.totalorder %s15, 3
      %p122 = por %p120, %p121
      %p124 = scmp.ne.s32.totalorder %s107, %s123
      %p125 = scmp.eq.s32.totalorder %s15, 0
      %p126 = por %p124, %p125
      %p127 = scmp.le.s32.totalorder 1, %s9
      %p128 = scmp.lt.s32.totalorder %s9, 5
      %p129 = pnand %p127, %p128
      %p130 = pneg %p129
      // Predicated region
      $region9: #{model_forward.1} parent=5 // pred_check
        _
      $region10: #{model_forward.1} parent=5 // pred_check_branch
        %132 = sbr.rel (%p129) target = $region12
      $region11: #{model_forward.1} parent=5 // pred_region
        %s133 = ssub.s32 %s9, 1
        // Predicated region
        $region13: #{model_forward.1} parent=11 // pred_check
          %p134 = pneg %p70
        $region14: #{model_forward.1} parent=11 // pred_check_branch
          %136 = sbr.rel (%p134) target = $region16
        $region15: #{model_forward.1} parent=11 // pred_region
          _
        $region16: #{model_forward.1} parent=11 // pred_fallthru
          _
        // Predicated region
        $region17: #{model_forward.1} parent=11 // pred_check
          %p137 = pneg %p91
        $region18: #{model_forward.1} parent=11 // pred_check_branch
          %139 = sbr.rel (%p137) target = $region20
        $region19: #{model_forward.1} parent=11 // pred_region
          _
        $region20: #{model_forward.1} parent=11 // pred_fallthru
          _
      $region12: #{model_forward.1} parent=5 // pred_fallthru
        _
      %p140 = scmp.lt.s32.totalorder %s9, 4
      // Predicated region
      $region21: #{model_forward.1} parent=5 // pred_check
        %p141 = pneg %p140
      $region22: #{model_forward.1} parent=5 // pred_check_branch
        %143 = sbr.rel (%p141) target = $region24
      $region23: #{model_forward.1} parent=5 // pred_region
        // Predicated region
        $region25: #{model_forward.1} parent=23 // pred_check
          %p144 = pneg %p43
        $region26: #{model_forward.1} parent=23 // pred_check_branch
          %146 = sbr.rel (%p144) target = $region28
        $region27: #{model_forward.1} parent=23 // pred_region
          %s147 = smul.u32 2, %s17
          %s148 = ssub.s32 3, %s147
          %p149 = scmp.lt.s32.totalorder %s148, 2
          %s150 = scalar_select %p149, %s148, 2
          %s151 = smul.u32 64, %s150
          %p152 = scmp.lt.s32.totalorder %s16, 1
          %s153 = scalar_select %p152, %s16, 1
          %p154 = scmp.lt.s32.totalorder %s147, 2
          %s155 = scalar_select %p154, %s147, 2
          %s156 = smul.addr %s153, 3
          %s157 = sadd.s32 %s155, %s156
          %s158 = smul.addr %s157, 4
          %s159 = scalar_lea.vmem %s0, %s158
          %s160 = smul.u32 2, %s17
          %s161 = ssub.s32 3, %s160
          %p162 = scmp.lt.s32.totalorder %s161, 2
          %s163 = scalar_select %p162, %s161, 2
          %s164 = smul.u32 64, %s163
        $region28: #{model_forward.1} parent=23 // pred_fallthru
          _
      $region24: #{model_forward.1} parent=5 // pred_fallthru
        _
      %p165 = scmp.le.s32.totalorder 1, %s9
      %p166 = scmp.lt.s32.totalorder %s9, 5
      %p167 = pnand %p165, %p166
      %p168 = pneg %p167
      // Predicated region
      $region29: #{model_forward.1} parent=5 // pred_check
        _
      $region30: #{model_forward.1} parent=5 // pred_check_branch
        %170 = sbr.rel (%p167) target = $region32
      $region31: #{model_forward.1} parent=5 // pred_region
        %s171 = ssub.s32 %s9, 1
        %s172 = smul.u32 2, %s19
        %s173 = ssub.s32 3, %s172
        %p174 = scmp.lt.s32.totalorder %s173, 2
        %s175 = scalar_select %p174, %s173, 2
        %s176 = smul.u32 64, %s175
        %p177 = scmp.lt.s32.totalorder %s18, 1
        %s178 = scalar_select %p177, %s18, 1
        %p179 = scmp.lt.s32.totalorder %s172, 2
        %s180 = scalar_select %p179, %s172, 2
        %s181 = smul.addr %s178, 3
        %s182 = sadd.s32 %s180, %s181
        %s183 = smul.addr %s182, 4
        %s184 = scalar_lea.vmem %s0, %s183
        %p185 = pneg %p49
        %p186 = pneg %p46
        %p187 = pneg %p70
        %p188 = pneg %p67
        %p189 = pneg %p91
        %p190 = pneg %p88
        %p191 = pneg %p119
        %p192 = pneg %p116
        %s193 = sand.u32 %s106, 1
        %s194 = sand.u32 %s106, 1
        %s195 = smul.addr %s194, 16
        %s196 = scalar_lea.vmem [#allocation2], %s195
        %s197 = smul.u32 2, %s19
        %s198 = ssub.s32 3, %s197
        %p199 = scmp.lt.s32.totalorder %s198, 2
        %s200 = scalar_select %p199, %s198, 2
        %s201 = smul.u32 64, %s200
        %p202 = scmp.lt.s32.totalorder %s18, 1
        %s203 = scalar_select %p202, %s18, 1
        %p204 = scmp.lt.s32.totalorder %s197, 2
        %s205 = scalar_select %p204, %s197, 2
        %s206 = smul.addr %s203, 3
        %s207 = sadd.s32 %s205, %s206
        %s208 = smul.addr %s207, 4
        %s209 = scalar_lea.vmem %s0, %s208
        %s210 = smul.u32 2, %s19
        %s211 = ssub.s32 3, %s210
        %p212 = scmp.lt.s32.totalorder %s211, 2
        %s213 = scalar_select %p212, %s211, 2
        %s214 = smul.u32 64, %s213
        %s215 = smul.u32 2, %s19
        %s216 = ssub.s32 3, %s215
        %p217 = scmp.lt.s32.totalorder %s216, 2
        %s218 = scalar_select %p217, %s216, 2
        %s219 = smul.u32 128, %s218
        %v220 = vld [vmem:[%s1] sm:$0xff]
        %v221 = vld [vmem:[%s209] sm:$0x77]
        %v222 = vld [vmem:[%s2] sm:$0xff]
        %224 = vset.pattern.permute.xlu0 0
        %225 = vperm.xlu0 %224, %v222
        %v226 = vpop.permute.xlu0 %225
        %v229 = vcombine.high %v221, %v221
        %vm230 = vcmask 23552
        %v232 = vsel %vm230, %v220, 0
        %vm234 = vcmask 1042432
        %v235 = vsel %vm234, %v221, 0
        %v237 = vsel %vm234, %v229, 0
        %239 = vmatprep.subr.mxu0 %v237
        %240 = vmatpush1.msra.mxu0 %v235
        %241 = vmatprep.subr.mxu0 0.0
        %242 = vmatpush1.msra.mxu0 0.0
        %243 = vmatprep.subr.mxu0 0.0
        %244 = vmatpush1.msra.mxu0 0.0
        %245 = vmatprep.subr.mxu0 0.0
        %246 = vmatpush1.msra.mxu0 0.0
        %247 = vmatprep.subr.mxu0 0.0
        %248 = vmatpush1.msra.mxu0 0.0
        %249 = vmatprep.subr.mxu0 0.0
        %250 = vmatpush1.msra.mxu0 0.0
        %251 = vmatprep.subr.mxu0 0.0
        %252 = vmatpush1.msra.mxu0 0.0
        %253 = vmatprep.subr.mxu0 0.0
        %254 = vmatpush1.msra.mxu0 0.0
        %255 = vmatprep.subr.mxu0 0.0
        %256 = vmatpush1.msra.mxu0 0.0
        %257 = vmatprep.subr.mxu0 0.0
        %258 = vmatpush1.msra.mxu0 0.0
        %259 = vmatprep.subr.mxu0 0.0
        %260 = vmatpush1.msra.mxu0 0.0
        %261 = vmatprep.subr.mxu0 0.0
        %262 = vmatpush1.msra.mxu0 0.0
        %263 = vmatprep.subr.mxu0 0.0
        %264 = vmatpush1.msra.mxu0 0.0
        %265 = vmatprep.subr.mxu0 0.0
        %266 = vmatpush1.msra.mxu0 0.0
        %267 = vmatprep.subr.mxu0 0.0
        %268 = vmatpush1.msra.mxu0 0.0
        %269 = vmatprep.subr.mxu0 0.0
        %270 = vmatpush1.msra.mxu0 0.0
        %271 = vmatprep.subr.mxu0 0.0
        %272 = vmatpush1.msra.mxu0 0.0
        %273 = vmatprep.subr.mxu0 0.0
        %274 = vmatpush1.msra.mxu0 0.0
        %275 = vmatprep.subr.mxu0 0.0
        %276 = vmatpush1.msra.mxu0 0.0
        %277 = vmatprep.subr.mxu0 0.0
        %278 = vmatpush1.msra.mxu0 0.0
        %279 = vmatprep.subr.mxu0 0.0
        %280 = vmatpush1.msra.mxu0 0.0
        %281 = vmatprep.subr.mxu0 0.0
        %282 = vmatpush1.msra.mxu0 0.0
        %283 = vmatprep.subr.mxu0 0.0
        %284 = vmatpush1.msra.mxu0 0.0
        %285 = vmatprep.subr.mxu0 0.0
        %286 = vmatpush1.msra.mxu0 0.0
        %287 = vmatprep.subr.mxu0 0.0
        %288 = vmatpush1.msra.mxu0 0.0
        %289 = vmatprep.subr.mxu0 0.0
        %290 = vmatpush1.msra.mxu0 0.0
        %291 = vmatprep.subr.mxu0 0.0
        %292 = vmatpush1.msra.mxu0 0.0
        %293 = vmatprep.subr.mxu0 0.0
        %294 = vmatpush1.msra.mxu0 0.0
        %295 = vmatprep.subr.mxu0 0.0
        %296 = vmatpush1.msra.mxu0 0.0
        %297 = vmatprep.subr.mxu0 0.0
        %298 = vmatpush1.msra.mxu0 0.0
        %299 = vmatprep.subr.mxu0 0.0
        %300 = vmatpush1.msra.mxu0 0.0
        %301 = vmatprep.subr.mxu0 0.0
        %302 = vmatpush1.msra.mxu0 0.0
        %303 = vmatprep.mubr.f32.mxu0 0.0
        %304 = vmatmul.mubr.f32.gmra.mrb[0].mxu0 %v232
        %v305 = vpop.f32.mrb[0].mxu0
        %v306 = vadd.f32 %v226, %v305
        %v307 = vpop.f32.mrb[0].mxu0
        %v308 = vadd.f32 %v226, %v307
        %309 = vdwg.mxu0
        %310 = vst [vmem:[%s196] sm:$0xff] %v306
        %311 = vst [vmem:[%s196 + $0x8] sm:$0xff] %v308
        %s312 = sand.u32 %s106, 1
        %s313 = sand.u32 %s106, 1
        %s314 = smul.addr %s313, 16
        %s315 = scalar_lea.vmem [#allocation2], %s314
        // Predicated region
        $region33: #{model_forward.1} parent=31 // pred_check
          %p316 = pneg %p116
        $region34: #{model_forward.1} parent=31 // pred_check_branch
          %318 = sbr.rel (%p316) target = $region36
        $region35: #{model_forward.1} parent=31 // pred_region
          %s319 = smul.u32 2, %s19
          %s320 = ssub.s32 3, %s319
          %p321 = scmp.lt.s32.totalorder %s320, 2
          %s322 = scalar_select %p321, %s320, 2
          %s323 = smul.u32 128, %s322
          %p324 = scmp.ne.s32.totalorder 0, %s323
          %s325 = smul.addr %s18, 3
          %s326 = sadd.s32 %s319, %s325
          %s327 = smul.addr %s326, 8
          %s328 = scalar_lea.vmem %s3, %s327
          %s329 = smul.u32 %s322, 8
          // Predicated region
          $region37: #{model_forward.1} parent=35 // pred_check
            %p330 = pneg %p324
          $region38: #{model_forward.1} parent=35 // pred_check_branch
            %332 = sbr.rel (%p330) target = $region40
          $region39: #{model_forward.1} parent=35 // pred_region
            %p333 = scmp.lt.u32.totalorder %s329, 8
            %p334 = pneg %p333
            // Predicated region
            $region41: #{model_forward.1} parent=39 // pred_check
              _
            $region42: #{model_forward.1} parent=39 // pred_check_branch
              %336 = sbr.rel (%p333) target = $region44
            $region43: #{model_forward.1} parent=39 // pred_region
              %s351 = sand.u32 %s329, 7
              %p352 = scmp.eq.s32.totalorder %s351, 0
              // Predicated region
              $region56: #{model_forward.1} parent=43 // pred_check
                %p353 = pneg %p352
              $region57: #{model_forward.1} parent=43 // pred_check_branch
                %355 = sbr.rel (%p353) target = $region59
              $region58: #{model_forward.1} parent=43 // pred_region
                %s356 = sshrl.u32 %s329, 3
                %s357 = sshrl.u32 %s356, 6
                // While loop
                $region60: #{model_forward.1} parent=58 // loop_pre_header
                  _
                $region61: #{model_forward.1} parent=58 // loop_header
                  %s361 = sphi 0, %s363
                  %p362 = scmp.ge.s32.totalorder %s361, %s357
                  %s366 = sphi 0, %s499
                  %s367 = sphi %s315, %s502
                  %s368 = sphi %s328, %s503
                $region62: #{model_forward.1} parent=58 // loop_header_branch
                  %365 = sbr.rel (%p362) target = $region66
                $region63: #{model_forward.1} parent=58 // loop_body
                  %v369 = vld [vmem:[%s367] sm:$0xff]
                  %370 = vst [vmem:[%s368] sm:$0xff] %v369
                  %v371 = vld [vmem:[%s367 + $0x8] sm:$0xff]
                  %372 = vst [vmem:[%s368 + $0x8] sm:$0xff] %v371
                  %v373 = vld [vmem:[%s367 + $0x10] sm:$0xff]
                  %374 = vst [vmem:[%s368 + $0x10] sm:$0xff] %v373
                  %v375 = vld [vmem:[%s367 + $0x18] sm:$0xff]
                  %376 = vst [vmem:[%s368 + $0x18] sm:$0xff] %v375
                  %v377 = vld [vmem:[%s367 + $0x20] sm:$0xff]
                  %378 = vst [vmem:[%s368 + $0x20] sm:$0xff] %v377
                  %v379 = vld [vmem:[%s367 + $0x28] sm:$0xff]
                  %380 = vst [vmem:[%s368 + $0x28] sm:$0xff] %v379
                  %v381 = vld [vmem:[%s367 + $0x30] sm:$0xff]
                  %382 = vst [vmem:[%s368 + $0x30] sm:$0xff] %v381
                  %v383 = vld [vmem:[%s367 + $0x38] sm:$0xff]
                  %384 = vst [vmem:[%s368 + $0x38] sm:$0xff] %v383
                  %v385 = vld [vmem:[%s367 + $0x40] sm:$0xff]
                  %386 = vst [vmem:[%s368 + $0x40] sm:$0xff] %v385
                  %v387 = vld [vmem:[%s367 + $0x48] sm:$0xff]
                  %388 = vst [vmem:[%s368 + $0x48] sm:$0xff] %v387
                  %v389 = vld [vmem:[%s367 + $0x50] sm:$0xff]
                  %390 = vst [vmem:[%s368 + $0x50] sm:$0xff] %v389
                  %v391 = vld [vmem:[%s367 + $0x58] sm:$0xff]
                  %392 = vst [vmem:[%s368 + $0x58] sm:$0xff] %v391
                  %v393 = vld [vmem:[%s367 + $0x60] sm:$0xff]
                  %394 = vst [vmem:[%s368 + $0x60] sm:$0xff] %v393
                  %v395 = vld [vmem:[%s367 + $0x68] sm:$0xff]
                  %396 = vst [vmem:[%s368 + $0x68] sm:$0xff] %v395
                  %v397 = vld [vmem:[%s367 + $0x70] sm:$0xff]
                  %398 = vst [vmem:[%s368 + $0x70] sm:$0xff] %v397
                  %v399 = vld [vmem:[%s367 + $0x78] sm:$0xff]
                  %400 = vst [vmem:[%s368 + $0x78] sm:$0xff] %v399
                  %v401 = vld [vmem:[%s367 + $0x80] sm:$0xff]
                  %402 = vst [vmem:[%s368 + $0x80] sm:$0xff] %v401
                  %v403 = vld [vmem:[%s367 + $0x88] sm:$0xff]
                  %404 = vst [vmem:[%s368 + $0x88] sm:$0xff] %v403
                  %v405 = vld [vmem:[%s367 + $0x90] sm:$0xff]
                  %406 = vst [vmem:[%s368 + $0x90] sm:$0xff] %v405
                  %v407 = vld [vmem:[%s367 + $0x98] sm:$0xff]
                  %408 = vst [vmem:[%s368 + $0x98] sm:$0xff] %v407
                  %v409 = vld [vmem:[%s367 + $0xa0] sm:$0xff]
                  %410 = vst [vmem:[%s368 + $0xa0] sm:$0xff] %v409
                  %v411 = vld [vmem:[%s367 + $0xa8] sm:$0xff]
                  %412 = vst [vmem:[%s368 + $0xa8] sm:$0xff] %v411
                  %v413 = vld [vmem:[%s367 + $0xb0] sm:$0xff]
                  %414 = vst [vmem:[%s368 + $0xb0] sm:$0xff] %v413
                  %v415 = vld [vmem:[%s367 + $0xb8] sm:$0xff]
                  %416 = vst [vmem:[%s368 + $0xb8] sm:$0xff] %v415
                  %v417 = vld [vmem:[%s367 + $0xc0] sm:$0xff]
                  %418 = vst [vmem:[%s368 + $0xc0] sm:$0xff] %v417
                  %v419 = vld [vmem:[%s367 + $0xc8] sm:$0xff]
                  %420 = vst [vmem:[%s368 + $0xc8] sm:$0xff] %v419
                  %v421 = vld [vmem:[%s367 + $0xd0] sm:$0xff]
                  %422 = vst [vmem:[%s368 + $0xd0] sm:$0xff] %v421
                  %v423 = vld [vmem:[%s367 + $0xd8] sm:$0xff]
                  %424 = vst [vmem:[%s368 + $0xd8] sm:$0xff] %v423
                  %v425 = vld [vmem:[%s367 + $0xe0] sm:$0xff]
                  %426 = vst [vmem:[%s368 + $0xe0] sm:$0xff] %v425
                  %v427 = vld [vmem:[%s367 + $0xe8] sm:$0xff]
                  %428 = vst [vmem:[%s368 + $0xe8] sm:$0xff] %v427
                  %v429 = vld [vmem:[%s367 + $0xf0] sm:$0xff]
                  %430 = vst [vmem:[%s368 + $0xf0] sm:$0xff] %v429
                  %v431 = vld [vmem:[%s367 + $0xf8] sm:$0xff]
                  %432 = vst [vmem:[%s368 + $0xf8] sm:$0xff] %v431
                  %v433 = vld [vmem:[%s367 + $0x100] sm:$0xff]
                  %434 = vst [vmem:[%s368 + $0x100] sm:$0xff] %v433
                  %v435 = vld [vmem:[%s367 + $0x108] sm:$0xff]
                  %436 = vst [vmem:[%s368 + $0x108] sm:$0xff] %v435
                  %v437 = vld [vmem:[%s367 + $0x110] sm:$0xff]
                  %438 = vst [vmem:[%s368 + $0x110] sm:$0xff] %v437
                  %v439 = vld [vmem:[%s367 + $0x118] sm:$0xff]
                  %440 = vst [vmem:[%s368 + $0x118] sm:$0xff] %v439
                  %v441 = vld [vmem:[%s367 + $0x120] sm:$0xff]
                  %442 = vst [vmem:[%s368 + $0x120] sm:$0xff] %v441
                  %v443 = vld [vmem:[%s367 + $0x128] sm:$0xff]
                  %444 = vst [vmem:[%s368 + $0x128] sm:$0xff] %v443
                  %v445 = vld [vmem:[%s367 + $0x130] sm:$0xff]
                  %446 = vst [vmem:[%s368 + $0x130] sm:$0xff] %v445
                  %v447 = vld [vmem:[%s367 + $0x138] sm:$0xff]
                  %448 = vst [vmem:[%s368 + $0x138] sm:$0xff] %v447
                  %v449 = vld [vmem:[%s367 + $0x140] sm:$0xff]
                  %450 = vst [vmem:[%s368 + $0x140] sm:$0xff] %v449
                  %v451 = vld [vmem:[%s367 + $0x148] sm:$0xff]
                  %452 = vst [vmem:[%s368 + $0x148] sm:$0xff] %v451
                  %v453 = vld [vmem:[%s367 + $0x150] sm:$0xff]
                  %454 = vst [vmem:[%s368 + $0x150] sm:$0xff] %v453
                  %v455 = vld [vmem:[%s367 + $0x158] sm:$0xff]
                  %456 = vst [vmem:[%s368 + $0x158] sm:$0xff] %v455
                  %v457 = vld [vmem:[%s367 + $0x160] sm:$0xff]
                  %458 = vst [vmem:[%s368 + $0x160] sm:$0xff] %v457
                  %v459 = vld [vmem:[%s367 + $0x168] sm:$0xff]
                  %460 = vst [vmem:[%s368 + $0x168] sm:$0xff] %v459
                  %v461 = vld [vmem:[%s367 + $0x170] sm:$0xff]
                  %462 = vst [vmem:[%s368 + $0x170] sm:$0xff] %v461
                  %v463 = vld [vmem:[%s367 + $0x178] sm:$0xff]
                  %464 = vst [vmem:[%s368 + $0x178] sm:$0xff] %v463
                  %v465 = vld [vmem:[%s367 + $0x180] sm:$0xff]
                  %466 = vst [vmem:[%s368 + $0x180] sm:$0xff] %v465
                  %v467 = vld [vmem:[%s367 + $0x188] sm:$0xff]
                  %468 = vst [vmem:[%s368 + $0x188] sm:$0xff] %v467
                  %v469 = vld [vmem:[%s367 + $0x190] sm:$0xff]
                  %470 = vst [vmem:[%s368 + $0x190] sm:$0xff] %v469
                  %v471 = vld [vmem:[%s367 + $0x198] sm:$0xff]
                  %472 = vst [vmem:[%s368 + $0x198] sm:$0xff] %v471
                  %v473 = vld [vmem:[%s367 + $0x1a0] sm:$0xff]
                  %474 = vst [vmem:[%s368 + $0x1a0] sm:$0xff] %v473
                  %v475 = vld [vmem:[%s367 + $0x1a8] sm:$0xff]
                  %476 = vst [vmem:[%s368 + $0x1a8] sm:$0xff] %v475
                  %v477 = vld [vmem:[%s367 + $0x1b0] sm:$0xff]
                  %478 = vst [vmem:[%s368 + $0x1b0] sm:$0xff] %v477
                  %v479 = vld [vmem:[%s367 + $0x1b8] sm:$0xff]
                  %480 = vst [vmem:[%s368 + $0x1b8] sm:$0xff] %v479
                  %v481 = vld [vmem:[%s367 + $0x1c0] sm:$0xff]
                  %482 = vst [vmem:[%s368 + $0x1c0] sm:$0xff] %v481
                  %v483 = vld [vmem:[%s367 + $0x1c8] sm:$0xff]
                  %484 = vst [vmem:[%s368 + $0x1c8] sm:$0xff] %v483
                  %v485 = vld [vmem:[%s367 + $0x1d0] sm:$0xff]
                  %486 = vst [vmem:[%s368 + $0x1d0] sm:$0xff] %v485
                  %v487 = vld [vmem:[%s367 + $0x1d8] sm:$0xff]
                  %488 = vst [vmem:[%s368 + $0x1d8] sm:$0xff] %v487
                  %v489 = vld [vmem:[%s367 + $0x1e0] sm:$0xff]
                  %490 = vst [vmem:[%s368 + $0x1e0] sm:$0xff] %v489
                  %v491 = vld [vmem:[%s367 + $0x1e8] sm:$0xff]
                  %492 = vst [vmem:[%s368 + $0x1e8] sm:$0xff] %v491
                  %v493 = vld [vmem:[%s367 + $0x1f0] sm:$0xff]
                  %494 = vst [vmem:[%s368 + $0x1f0] sm:$0xff] %v493
                  %v495 = vld [vmem:[%s367 + $0x1f8] sm:$0xff]
                  %496 = vst [vmem:[%s368 + $0x1f8] sm:$0xff] %v495
                  %s497 = sadd.s32 1, %s366
                  %p498 = scmp.ge.s32.totalorder %s497, %s357
                  %s499 = scalar_select %p498, 0, %s497
                  %s500 = smul.u32 %s499, 512
                  %s501 = smul.u32 %s499, 512
                  %s502 = scalar_lea.vmem %s315, %s500 [#allocation2]
                  %s503 = scalar_lea.vmem %s328, %s501
                $region64: #{model_forward.1} parent=58 // loop_footer
                  %s363 = sadd.s32 %s361, 1
                $region65: #{model_forward.1} parent=58 // loop_footer_branch
                  %360 = sbr.rel target = $region61
                $region66: #{model_forward.1} parent=58 // loop_exit
                  _
                %s504 = sshrl.u32 %s356, 6
                %s505 = sand.u32 %s356, 63
                %s506 = smul.u32 %s504, 64
                %s507 = smul.u32 128, %s506
                %s508 = sshra.s32 %s507, 4
                %s509 = scalar_lea.vmem %s315, %s508 [#allocation2]
                %s510 = smul.u32 128, %s506
                %s511 = sshra.s32 %s510, 4
                %s512 = scalar_lea.vmem %s328, %s511
                // While loop
                $region67: #{model_forward.1} parent=58 // loop_pre_header
                  _
                $region68: #{model_forward.1} parent=58 // loop_header
                  %s516 = sphi 0, %s518
                  %p517 = scmp.ge.s32.totalorder %s516, %s505
                  %s521 = sphi 0, %s528
                  %s522 = sphi %s509, %s531
                  %s523 = sphi %s512, %s532
                $region69: #{model_forward.1} parent=58 // loop_header_branch
                  %520 = sbr.rel (%p517) target = $region73
                $region70: #{model_forward.1} parent=58 // loop_body
                  %v524 = vld [vmem:[%s522] sm:$0xff]
                  %525 = vst [vmem:[%s523] sm:$0xff] %v524
                  %s526 = sadd.s32 1, %s521
                  %p527 = scmp.ge.s32.totalorder %s526, %s505
                  %s528 = scalar_select %p527, 0, %s526
                  %s529 = smul.u32 %s528, 8
                  %s530 = smul.u32 %s528, 8
                  %s531 = scalar_lea.vmem %s509, %s529 [#allocation2]
                  %s532 = scalar_lea.vmem %s512, %s530
                $region71: #{model_forward.1} parent=58 // loop_footer
                  %s518 = sadd.s32 %s516, 1
                $region72: #{model_forward.1} parent=58 // loop_footer_branch
                  %515 = sbr.rel target = $region68
                $region73: #{model_forward.1} parent=58 // loop_exit
                  _
              $region59: #{model_forward.1} parent=43 // pred_fallthru
                _
              %p533 = pneg %p352
              // Predicated region
              $region74: #{model_forward.1} parent=43 // pred_check
                _
              $region75: #{model_forward.1} parent=43 // pred_check_branch
                %535 = sbr.rel (%p352) target = $region77
              $region76: #{model_forward.1} parent=43 // pred_region
                %s536 = sand.u32 %s329, 7
                %s537 = ssub.s32 %s329, %s536
                %s538 = scalar_lea.vmem %s315, %s537 [#allocation2]
                %s539 = ssub.s32 %s329, %s536
                %s540 = scalar_lea.vmem %s328, %s539
                %s541 = sshrl.u32 %s329, 3
                %s542 = sshrl.u32 %s541, 6
                // While loop
                $region78: #{model_forward.1} parent=76 // loop_pre_header
                  _
                $region79: #{model_forward.1} parent=76 // loop_header
                  %s546 = sphi 0, %s548
                  %p547 = scmp.ge.s32.totalorder %s546, %s542
                  %s551 = sphi 0, %s684
                  %s552 = sphi %s315, %s687
                  %s553 = sphi %s328, %s688
                $region80: #{model_forward.1} parent=76 // loop_header_branch
                  %550 = sbr.rel (%p547) target = $region84
                $region81: #{model_forward.1} parent=76 // loop_body
                  %v554 = vld [vmem:[%s552] sm:$0xff]
                  %555 = vst [vmem:[%s553] sm:$0xff] %v554
                  %v556 = vld [vmem:[%s552 + $0x8] sm:$0xff]
                  %557 = vst [vmem:[%s553 + $0x8] sm:$0xff] %v556
                  %v558 = vld [vmem:[%s552 + $0x10] sm:$0xff]
                  %559 = vst [vmem:[%s553 + $0x10] sm:$0xff] %v558
                  %v560 = vld [vmem:[%s552 + $0x18] sm:$0xff]
                  %561 = vst [vmem:[%s553 + $0x18] sm:$0xff] %v560
                  %v562 = vld [vmem:[%s552 + $0x20] sm:$0xff]
                  %563 = vst [vmem:[%s553 + $0x20] sm:$0xff] %v562
                  %v564 = vld [vmem:[%s552 + $0x28] sm:$0xff]
                  %565 = vst [vmem:[%s553 + $0x28] sm:$0xff] %v564
                  %v566 = vld [vmem:[%s552 + $0x30] sm:$0xff]
                  %567 = vst [vmem:[%s553 + $0x30] sm:$0xff] %v566
                  %v568 = vld [vmem:[%s552 + $0x38] sm:$0xff]
                  %569 = vst [vmem:[%s553 + $0x38] sm:$0xff] %v568
                  %v570 = vld [vmem:[%s552 + $0x40] sm:$0xff]
                  %571 = vst [vmem:[%s553 + $0x40] sm:$0xff] %v570
                  %v572 = vld [vmem:[%s552 + $0x48] sm:$0xff]
                  %573 = vst [vmem:[%s553 + $0x48] sm:$0xff] %v572
                  %v574 = vld [vmem:[%s552 + $0x50] sm:$0xff]
                  %575 = vst [vmem:[%s553 + $0x50] sm:$0xff] %v574
                  %v576 = vld [vmem:[%s552 + $0x58] sm:$0xff]
                  %577 = vst [vmem:[%s553 + $0x58] sm:$0xff] %v576
                  %v578 = vld [vmem:[%s552 + $0x60] sm:$0xff]
                  %579 = vst [vmem:[%s553 + $0x60] sm:$0xff] %v578
                  %v580 = vld [vmem:[%s552 + $0x68] sm:$0xff]
                  %581 = vst [vmem:[%s553 + $0x68] sm:$0xff] %v580
                  %v582 = vld [vmem:[%s552 + $0x70] sm:$0xff]
                  %583 = vst [vmem:[%s553 + $0x70] sm:$0xff] %v582
                  %v584 = vld [vmem:[%s552 + $0x78] sm:$0xff]
                  %585 = vst [vmem:[%s553 + $0x78] sm:$0xff] %v584
                  %v586 = vld [vmem:[%s552 + $0x80] sm:$0xff]
                  %587 = vst [vmem:[%s553 + $0x80] sm:$0xff] %v586
                  %v588 = vld [vmem:[%s552 + $0x88] sm:$0xff]
                  %589 = vst [vmem:[%s553 + $0x88] sm:$0xff] %v588
                  %v590 = vld [vmem:[%s552 + $0x90] sm:$0xff]
                  %591 = vst [vmem:[%s553 + $0x90] sm:$0xff] %v590
                  %v592 = vld [vmem:[%s552 + $0x98] sm:$0xff]
                  %593 = vst [vmem:[%s553 + $0x98] sm:$0xff] %v592
                  %v594 = vld [vmem:[%s552 + $0xa0] sm:$0xff]
                  %595 = vst [vmem:[%s553 + $0xa0] sm:$0xff] %v594
                  %v596 = vld [vmem:[%s552 + $0xa8] sm:$0xff]
                  %597 = vst [vmem:[%s553 + $0xa8] sm:$0xff] %v596
                  %v598 = vld [vmem:[%s552 + $0xb0] sm:$0xff]
                  %599 = vst [vmem:[%s553 + $0xb0] sm:$0xff] %v598
                  %v600 = vld [vmem:[%s552 + $0xb8] sm:$0xff]
                  %601 = vst [vmem:[%s553 + $0xb8] sm:$0xff] %v600
                  %v602 = vld [vmem:[%s552 + $0xc0] sm:$0xff]
                  %603 = vst [vmem:[%s553 + $0xc0] sm:$0xff] %v602
                  %v604 = vld [vmem:[%s552 + $0xc8] sm:$0xff]
                  %605 = vst [vmem:[%s553 + $0xc8] sm:$0xff] %v604
                  %v606 = vld [vmem:[%s552 + $0xd0] sm:$0xff]
                  %607 = vst [vmem:[%s553 + $0xd0] sm:$0xff] %v606
                  %v608 = vld [vmem:[%s552 + $0xd8] sm:$0xff]
                  %609 = vst [vmem:[%s553 + $0xd8] sm:$0xff] %v608
                  %v610 = vld [vmem:[%s552 + $0xe0] sm:$0xff]
                  %611 = vst [vmem:[%s553 + $0xe0] sm:$0xff] %v610
                  %v612 = vld [vmem:[%s552 + $0xe8] sm:$0xff]
                  %613 = vst [vmem:[%s553 + $0xe8] sm:$0xff] %v612
                  %v614 = vld [vmem:[%s552 + $0xf0] sm:$0xff]
                  %615 = vst [vmem:[%s553 + $0xf0] sm:$0xff] %v614
                  %v616 = vld [vmem:[%s552 + $0xf8] sm:$0xff]
                  %617 = vst [vmem:[%s553 + $0xf8] sm:$0xff] %v616
                  %v618 = vld [vmem:[%s552 + $0x100] sm:$0xff]
                  %619 = vst [vmem:[%s553 + $0x100] sm:$0xff] %v618
                  %v620 = vld [vmem:[%s552 + $0x108] sm:$0xff]
                  %621 = vst [vmem:[%s553 + $0x108] sm:$0xff] %v620
                  %v622 = vld [vmem:[%s552 + $0x110] sm:$0xff]
                  %623 = vst [vmem:[%s553 + $0x110] sm:$0xff] %v622
                  %v624 = vld [vmem:[%s552 + $0x118] sm:$0xff]
                  %625 = vst [vmem:[%s553 + $0x118] sm:$0xff] %v624
                  %v626 = vld [vmem:[%s552 + $0x120] sm:$0xff]
                  %627 = vst [vmem:[%s553 + $0x120] sm:$0xff] %v626
                  %v628 = vld [vmem:[%s552 + $0x128] sm:$0xff]
                  %629 = vst [vmem:[%s553 + $0x128] sm:$0xff] %v628
                  %v630 = vld [vmem:[%s552 + $0x130] sm:$0xff]
                  %631 = vst [vmem:[%s553 + $0x130] sm:$0xff] %v630
                  %v632 = vld [vmem:[%s552 + $0x138] sm:$0xff]
                  %633 = vst [vmem:[%s553 + $0x138] sm:$0xff] %v632
                  %v634 = vld [vmem:[%s552 + $0x140] sm:$0xff]
                  %635 = vst [vmem:[%s553 + $0x140] sm:$0xff] %v634
                  %v636 = vld [vmem:[%s552 + $0x148] sm:$0xff]
                  %637 = vst [vmem:[%s553 + $0x148] sm:$0xff] %v636
                  %v638 = vld [vmem:[%s552 + $0x150] sm:$0xff]
                  %639 = vst [vmem:[%s553 + $0x150] sm:$0xff] %v638
                  %v640 = vld [vmem:[%s552 + $0x158] sm:$0xff]
                  %641 = vst [vmem:[%s553 + $0x158] sm:$0xff] %v640
                  %v642 = vld [vmem:[%s552 + $0x160] sm:$0xff]
                  %643 = vst [vmem:[%s553 + $0x160] sm:$0xff] %v642
                  %v644 = vld [vmem:[%s552 + $0x168] sm:$0xff]
                  %645 = vst [vmem:[%s553 + $0x168] sm:$0xff] %v644
                  %v646 = vld [vmem:[%s552 + $0x170] sm:$0xff]
                  %647 = vst [vmem:[%s553 + $0x170] sm:$0xff] %v646
                  %v648 = vld [vmem:[%s552 + $0x178] sm:$0xff]
                  %649 = vst [vmem:[%s553 + $0x178] sm:$0xff] %v648
                  %v650 = vld [vmem:[%s552 + $0x180] sm:$0xff]
                  %651 = vst [vmem:[%s553 + $0x180] sm:$0xff] %v650
                  %v652 = vld [vmem:[%s552 + $0x188] sm:$0xff]
                  %653 = vst [vmem:[%s553 + $0x188] sm:$0xff] %v652
                  %v654 = vld [vmem:[%s552 + $0x190] sm:$0xff]
                  %655 = vst [vmem:[%s553 + $0x190] sm:$0xff] %v654
                  %v656 = vld [vmem:[%s552 + $0x198] sm:$0xff]
                  %657 = vst [vmem:[%s553 + $0x198] sm:$0xff] %v656
                  %v658 = vld [vmem:[%s552 + $0x1a0] sm:$0xff]
                  %659 = vst [vmem:[%s553 + $0x1a0] sm:$0xff] %v658
                  %v660 = vld [vmem:[%s552 + $0x1a8] sm:$0xff]
                  %661 = vst [vmem:[%s553 + $0x1a8] sm:$0xff] %v660
                  %v662 = vld [vmem:[%s552 + $0x1b0] sm:$0xff]
                  %663 = vst [vmem:[%s553 + $0x1b0] sm:$0xff] %v662
                  %v664 = vld [vmem:[%s552 + $0x1b8] sm:$0xff]
                  %665 = vst [vmem:[%s553 + $0x1b8] sm:$0xff] %v664
                  %v666 = vld [vmem:[%s552 + $0x1c0] sm:$0xff]
                  %667 = vst [vmem:[%s553 + $0x1c0] sm:$0xff] %v666
                  %v668 = vld [vmem:[%s552 + $0x1c8] sm:$0xff]
                  %669 = vst [vmem:[%s553 + $0x1c8] sm:$0xff] %v668
                  %v670 = vld [vmem:[%s552 + $0x1d0] sm:$0xff]
                  %671 = vst [vmem:[%s553 + $0x1d0] sm:$0xff] %v670
                  %v672 = vld [vmem:[%s552 + $0x1d8] sm:$0xff]
                  %673 = vst [vmem:[%s553 + $0x1d8] sm:$0xff] %v672
                  %v674 = vld [vmem:[%s552 + $0x1e0] sm:$0xff]
                  %675 = vst [vmem:[%s553 + $0x1e0] sm:$0xff] %v674
                  %v676 = vld [vmem:[%s552 + $0x1e8] sm:$0xff]
                  %677 = vst [vmem:[%s553 + $0x1e8] sm:$0xff] %v676
                  %v678 = vld [vmem:[%s552 + $0x1f0] sm:$0xff]
                  %679 = vst [vmem:[%s553 + $0x1f0] sm:$0xff] %v678
                  %v680 = vld [vmem:[%s552 + $0x1f8] sm:$0xff]
                  %681 = vst [vmem:[%s553 + $0x1f8] sm:$0xff] %v680
                  %s682 = sadd.s32 1, %s551
                  %p683 = scmp.ge.s32.totalorder %s682, %s542
                  %s684 = scalar_select %p683, 0, %s682
                  %s685 = smul.u32 %s684, 512
                  %s686 = smul.u32 %s684, 512
                  %s687 = scalar_lea.vmem %s315, %s685 [#allocation2]
                  %s688 = scalar_lea.vmem %s328, %s686
                $region82: #{model_forward.1} parent=76 // loop_footer
                  %s548 = sadd.s32 %s546, 1
                $region83: #{model_forward.1} parent=76 // loop_footer_branch
                  %545 = sbr.rel target = $region79
                $region84: #{model_forward.1} parent=76 // loop_exit
                  _
                %s689 = sshrl.u32 %s541, 6
                %s690 = sand.u32 %s541, 63
                %s691 = smul.u32 %s689, 64
                %s692 = smul.u32 128, %s691
                %s693 = sshra.s32 %s692, 4
                %s694 = scalar_lea.vmem %s315, %s693 [#allocation2]
                %s695 = smul.u32 128, %s691
                %s696 = sshra.s32 %s695, 4
                %s697 = scalar_lea.vmem %s328, %s696
                // While loop
                $region85: #{model_forward.1} parent=76 // loop_pre_header
                  _
                $region86: #{model_forward.1} parent=76 // loop_header
                  %s701 = sphi 0, %s703
                  %p702 = scmp.ge.s32.totalorder %s701, %s690
                  %s706 = sphi 0, %s713
                  %s707 = sphi %s694, %s716
                  %s708 = sphi %s697, %s717
                $region87: #{model_forward.1} parent=76 // loop_header_branch
                  %705 = sbr.rel (%p702) target = $region91
                $region88: #{model_forward.1} parent=76 // loop_body
                  %v709 = vld [vmem:[%s707] sm:$0xff]
                  %710 = vst [vmem:[%s708] sm:$0xff] %v709
                  %s711 = sadd.s32 1, %s706
                  %p712 = scmp.ge.s32.totalorder %s711, %s690
                  %s713 = scalar_select %p712, 0, %s711
                  %s714 = smul.u32 %s713, 8
                  %s715 = smul.u32 %s713, 8
                  %s716 = scalar_lea.vmem %s694, %s714 [#allocation2]
                  %s717 = scalar_lea.vmem %s697, %s715
                $region89: #{model_forward.1} parent=76 // loop_footer
                  %s703 = sadd.s32 %s701, 1
                $region90: #{model_forward.1} parent=76 // loop_footer_branch
                  %700 = sbr.rel target = $region86
                $region91: #{model_forward.1} parent=76 // loop_exit
                  _
                %s718 = sshllo.u32 0, %s536
                loop: start=0, step=1, limit=1
                $region92: #{model_forward.1} parent=76 // loop_pre_header
                  _
                $region93: #{model_forward.1} parent=76 // loop_header
                  %s720 = sphi 0, %s724
                  %p721 = scmp.ge.s32.totalorder %s720, 1
                  %s725 = sphi %s538, %s538
                  %s726 = sphi %s540, %s540
                $region94: #{model_forward.1} parent=76 // loop_header_branch
                  %723 = sbr.rel (%p721) target = $region98
                $region95: #{model_forward.1} parent=76 // loop_body
                  %v727 = vld [vmem:[%s725] sm:%s718]
                  %728 = vst [vmem:[%s726] sm:%s718] %v727
                $region96: #{model_forward.1} parent=76 // loop_footer
                  %s724 = sadd.s32 1, %s720
                $region97: #{model_forward.1} parent=76 // loop_footer_branch
                  %719 = sbr.rel target = $region93
                $region98: #{model_forward.1} parent=76 // loop_exit
                  _
              $region77: #{model_forward.1} parent=43 // pred_fallthru
                _
            $region44: #{model_forward.1} parent=39 // pred_fallthru
              _
            // Predicated region
            $region45: #{model_forward.1} parent=39 // pred_check
              %p337 = pneg %p333
            $region46: #{model_forward.1} parent=39 // pred_check_branch
              %339 = sbr.rel (%p337) target = $region48
            $region47: #{model_forward.1} parent=39 // pred_region
              %s340 = sshllo.u32 0, %s329
              loop: start=0, step=1, limit=1
              $region49: #{model_forward.1} parent=47 // loop_pre_header
                _
              $region50: #{model_forward.1} parent=47 // loop_header
                %s342 = sphi 0, %s346
                %p343 = scmp.ge.s32.totalorder %s342, 1
                %s347 = sphi %s315, %s315
                %s348 = sphi %s328, %s328
              $region51: #{model_forward.1} parent=47 // loop_header_branch
                %345 = sbr.rel (%p343) target = $region55
              $region52: #{model_forward.1} parent=47 // loop_body
                %v349 = vld [vmem:[%s347] sm:%s340]
                %350 = vst [vmem:[%s348] sm:%s340] %v349
              $region53: #{model_forward.1} parent=47 // loop_footer
                %s346 = sadd.s32 1, %s342
              $region54: #{model_forward.1} parent=47 // loop_footer_branch
                %341 = sbr.rel target = $region50
              $region55: #{model_forward.1} parent=47 // loop_exit
                _
            $region48: #{model_forward.1} parent=39 // pred_fallthru
              _
          $region40: #{model_forward.1} parent=35 // pred_fallthru
            _
          %729 = vnop
        $region36: #{model_forward.1} parent=31 // pred_fallthru
          _
      $region32: #{model_forward.1} parent=5 // pred_fallthru
        _
      %p730 = scmp.le.s32.totalorder 2, %s9
      // Predicated region
      $region99: #{model_forward.1} parent=5 // pred_check
        %p731 = pneg %p730
      $region100: #{model_forward.1} parent=5 // pred_check_branch
        %733 = sbr.rel (%p731) target = $region102
      $region101: #{model_forward.1} parent=5 // pred_region
        %s734 = ssub.s32 %s9, 2
        // Predicated region
        $region103: #{model_forward.1} parent=101 // pred_check
          %p735 = pneg %p122
        $region104: #{model_forward.1} parent=101 // pred_check_branch
          %737 = sbr.rel (%p735) target = $region106
        $region105: #{model_forward.1} parent=101 // pred_region
          %s738 = sand.u32 %s107, 1
          %s739 = sand.u32 %s107, 1
          %s740 = smul.addr %s739, 16
          %s741 = scalar_lea.vmem [#allocation2], %s740
        $region106: #{model_forward.1} parent=101 // pred_fallthru
          _
      $region102: #{model_forward.1} parent=5 // pred_fallthru
        _
    $region6: #{model_forward.1} parent=1 // loop_footer
      %s13 = sadd.s32 1, %s9
    $region7: #{model_forward.1} parent=1 // loop_footer_branch
      %8 = sbr.rel target = $region3
    $region8: #{model_forward.1} parent=1 // loop_exit
      _

</llo_original>
